<compile_context>
chip_gen: v7x
topology: tpu7x:2x2x1
jax: 0.10.0
libtpu: 0.0.40
codegen_flags: <defaults>
</compile_context>

<pallas_src>
import jax
import jax.numpy as jnp
from jax.experimental import pallas as pl
from jax.experimental.pallas import tpu as pltpu


# ----------------------------------------------------------------------------
# Fused kernel: Linear1 + bias -> ReLU -> Linear2 + bias   (Dropout(0.0) == id)
# ----------------------------------------------------------------------------
def _ffn_kernel(x_ref, w1t_ref, b1_ref, w2t_ref, b2_ref, o_ref):
    x = x_ref[0]                                                  # (N, D)

    # h = relu(x @ W1.T + b1)
    h = jnp.dot(x, w1t_ref[...], preferred_element_type=jnp.float32)   # (N, Hd)
    h = h + b1_ref[...]                                           # (1, Hd) broadcast
    h = jnp.maximum(h, 0.0)

    # y = h @ W2.T + b2
    y = jnp.dot(h, w2t_ref[...], preferred_element_type=jnp.float32)   # (N, D)
    y = y + b2_ref[...]                                           # (1, D) broadcast

    # TODO(synk): Dropout(p>0) would need pltpu.prng_seed/prng_random_bits;
    # the module uses dropout=0.0 so it is the identity here.
    o_ref[0] = y.astype(o_ref.dtype)


# ----------------------------------------------------------------------------
# Wrapper
# ----------------------------------------------------------------------------
@jax.jit
def feedforward_forward(x, w1, b1, w2, b2):
    """x: (B, N, dim); w1: (hidden, dim); b1: (hidden,); w2: (dim, hidden); b2: (dim,)."""
    B, N, D = x.shape
    H = w1.shape[0]

    w1_t = w1.T                      # (D, H)  so the kernel does x @ W1.T directly
    w2_t = w2.T                      # (H, D)
    b1_r = b1.reshape(1, H)
    b2_r = b2.reshape(1, D)

    return pl.pallas_call(
        _ffn_kernel,
        out_shape=jax.ShapeDtypeStruct((B, N, D), x.dtype),
        grid=(B,),
        in_specs=[
            pl.BlockSpec((1, N, D), lambda b: (b, 0, 0)),   # x (per-batch tile)
            pl.BlockSpec((D, H), lambda b: (0, 0)),         # W1.T  (resident)
            pl.BlockSpec((1, H), lambda b: (0, 0)),         # b1    (resident)
            pl.BlockSpec((H, D), lambda b: (0, 0)),         # W2.T  (resident)
            pl.BlockSpec((1, D), lambda b: (0, 0)),         # b2    (resident)
        ],
        out_specs=pl.BlockSpec((1, N, D), lambda b: (b, 0, 0)),
        compiler_params=pltpu.CompilerParams(
            dimension_semantics=("parallel",)),              # v7x: one batch per TC
    )(x, w1_t, b1_r, w2_t, b2_r)


# ----------------------------------------------------------------------------
# Pure-JAX reference (mirrors the PyTorch forward exactly; dropout=0.0)
# ----------------------------------------------------------------------------
def feedforward_reference(x, w1, b1, w2, b2):
    h = jnp.maximum(x @ w1.T + b1, 0.0)
    return h @ w2.T + b2


if __name__ == "__main__":
    # Small shapes consistent with the module's token-major "b n c" usage.
    B, N, DIM, HIDDEN = 2, 16, 64, 128

    key = jax.random.PRNGKey(0)
    k1, k2, k3, k4, k5 = jax.random.split(key, 5)

    # nn.Linear-style deterministic parameters.
    bound1 = 1.0 / (DIM ** 0.5)
    bound2 = 1.0 / (HIDDEN ** 0.5)
    w1 = jax.random.uniform(k1, (HIDDEN, DIM), jnp.float32, -bound1, bound1)
    b1 = jax.random.uniform(k2, (HIDDEN,), jnp.float32, -bound1, bound1)
    w2 = jax.random.uniform(k3, (DIM, HIDDEN), jnp.float32, -bound2, bound2)
    b2 = jax.random.uniform(k4, (DIM,), jnp.float32, -bound2, bound2)

    x = jax.random.normal(k5, (B, N, DIM), jnp.float32)

    out = feedforward_forward(x, w1, b1, w2, b2)
    out = jax.block_until_ready(out)

    ref = feedforward_reference(x, w1, b1, w2, b2)
    assert out.shape == (B, N, DIM)
    assert jnp.allclose(out, ref, rtol=1e-4, atol=1e-4), "mismatch vs reference"

    print("KERNEL_OK")
</pallas_src>

<mosaic_0001>
module attributes {stable_mosaic.version = 11 : i64} {
  func.func @_ffn_kernel(%arg0: i32, %arg1: memref<1x16x64xf32, #tpu.memory_space<vmem>>, %arg2: memref<64x128xf32, #tpu.memory_space<vmem>>, %arg3: memref<1x128xf32, #tpu.memory_space<vmem>>, %arg4: memref<128x64xf32, #tpu.memory_space<vmem>>, %arg5: memref<1x64xf32, #tpu.memory_space<vmem>>, %arg6: memref<1x16x64xf32, #tpu.memory_space<vmem>>) attributes {dimension_semantics = [#tpu.dimension_semantics<parallel>], iteration_bounds = array<i64: 2>, scalar_prefetch = 0 : i64, scratch_operands = 0 : i64, tpu.core_type = #tpu.core_type<tc>, window_params = [{transform_indices = @transform_0, window_bounds = array<i64: 1, 16, 64>}, {pipeline_mode = #tpu.pipeline_mode<synchronous>, transform_indices = @transform_1, window_bounds = array<i64: 64, 128>}, {pipeline_mode = #tpu.pipeline_mode<synchronous>, transform_indices = @transform_2, window_bounds = array<i64: 1, 128>}, {pipeline_mode = #tpu.pipeline_mode<synchronous>, transform_indices = @transform_3, window_bounds = array<i64: 128, 64>}, {pipeline_mode = #tpu.pipeline_mode<synchronous>, transform_indices = @transform_4, window_bounds = array<i64: 1, 64>}, {transform_indices = @transform_5, window_bounds = array<i64: 1, 16, 64>}]} {
    %c0 = arith.constant 0 : index
    %c0_0 = arith.constant 0 : index
    %c0_1 = arith.constant 0 : index
    %0 = vector.load %arg1[%c0, %c0_0, %c0_1] : memref<1x16x64xf32, #tpu.memory_space<vmem>>, vector<1x16x64xf32>
    %1 = vector.shape_cast %0 : vector<1x16x64xf32> to vector<16x64xf32>
    %c0_2 = arith.constant 0 : index
    %c0_3 = arith.constant 0 : index
    %2 = vector.load %arg2[%c0_2, %c0_3] : memref<64x128xf32, #tpu.memory_space<vmem>>, vector<64x128xf32>
    %cst = arith.constant dense<0.000000e+00> : vector<16x128xf32>
    %3 = tpu.matmul %1, %2, %cst {dimension_numbers = #tpu.dot_dimension_numbers<[1], [0], [0], [1], [0, 0, 1, 1], [], []>} : vector<16x64xf32>, vector<64x128xf32>, vector<16x128xf32> -> vector<16x128xf32>
    %c0_4 = arith.constant 0 : index
    %c0_5 = arith.constant 0 : index
    %4 = vector.load %arg3[%c0_4, %c0_5] : memref<1x128xf32, #tpu.memory_space<vmem>>, vector<1x128xf32>
    %5 = vector.broadcast %4 : vector<1x128xf32> to vector<16x128xf32>
    %6 = arith.addf %3, %5 : vector<16x128xf32>
    %cst_6 = arith.constant 0.000000e+00 : f32
    %7 = vector.broadcast %cst_6 : f32 to vector<16x128xf32>
    %8 = arith.maximumf %6, %7 : vector<16x128xf32>
    %c0_7 = arith.constant 0 : index
    %c0_8 = arith.constant 0 : index
    %9 = vector.load %arg4[%c0_7, %c0_8] : memref<128x64xf32, #tpu.memory_space<vmem>>, vector<128x64xf32>
    %cst_9 = arith.constant dense<0.000000e+00> : vector<16x64xf32>
    %10 = tpu.matmul %8, %9, %cst_9 {dimension_numbers = #tpu.dot_dimension_numbers<[1], [0], [0], [1], [0, 0, 1, 1], [], []>} : vector<16x128xf32>, vector<128x64xf32>, vector<16x64xf32> -> vector<16x64xf32>
    %c0_10 = arith.constant 0 : index
    %c0_11 = arith.constant 0 : index
    %11 = vector.load %arg5[%c0_10, %c0_11] : memref<1x64xf32, #tpu.memory_space<vmem>>, vector<1x64xf32>
    %12 = vector.broadcast %11 : vector<1x64xf32> to vector<16x64xf32>
    %13 = arith.addf %10, %12 : vector<16x64xf32>
    %c0_12 = arith.constant 0 : index
    %c0_13 = arith.constant 0 : index
    %c0_14 = arith.constant 0 : index
    %14 = vector.load %arg6[%c0_12, %c0_13, %c0_14] : memref<1x16x64xf32, #tpu.memory_space<vmem>>, vector<1x16x64xf32>
    %15 = vector.shape_cast %14 : vector<1x16x64xf32> to vector<16x64xf32>
    %16 = vector.shape_cast %13 : vector<16x64xf32> to vector<1x16x64xf32>
    tpu.vector_store %arg6[%c0_12, %c0_13, %c0_14], %16 {strides = array<i32>} : memref<1x16x64xf32, #tpu.memory_space<vmem>>, vector<1x16x64xf32>,
    return
  }
  func.func @transform_0(%arg0: i32) -> (i32, i32, i32) {
    %c0_i32 = arith.constant 0 : i32
    %c0_i32_0 = arith.constant 0 : i32
    %c0_i32_1 = arith.constant 0 : i32
    return %arg0, %c0_i32, %c0_i32_0 : i32, i32, i32
  }
  func.func @transform_1(%arg0: i32) -> (i32, i32) {
    %c0_i32 = arith.constant 0 : i32
    %c0_i32_0 = arith.constant 0 : i32
    %c0_i32_1 = arith.constant 0 : i32
    return %c0_i32, %c0_i32_0 : i32, i32
  }
  func.func @transform_2(%arg0: i32) -> (i32, i32) {
    %c0_i32 = arith.constant 0 : i32
    %c0_i32_0 = arith.constant 0 : i32
    %c0_i32_1 = arith.constant 0 : i32
    return %c0_i32, %c0_i32_0 : i32, i32
  }
  func.func @transform_3(%arg0: i32) -> (i32, i32) {
    %c0_i32 = arith.constant 0 : i32
    %c0_i32_0 = arith.constant 0 : i32
    %c0_i32_1 = arith.constant 0 : i32
    return %c0_i32, %c0_i32_0 : i32, i32
  }
  func.func @transform_4(%arg0: i32) -> (i32, i32) {
    %c0_i32 = arith.constant 0 : i32
    %c0_i32_0 = arith.constant 0 : i32
    %c0_i32_1 = arith.constant 0 : i32
    return %c0_i32, %c0_i32_0 : i32, i32
  }
  func.func @transform_5(%arg0: i32) -> (i32, i32, i32) {
    %c0_i32 = arith.constant 0 : i32
    %c0_i32_0 = arith.constant 0 : i32
    %c0_i32_1 = arith.constant 0 : i32
    return %arg0, %c0_i32, %c0_i32_0 : i32, i32, i32
  }
}

</mosaic_0001>

<llo_original>
// kernel: feedforward_forward.1
$region0: #{feedforward_forward.1}
  #allocation0 [shape = 'u32[]', space=smem, size = 0x4, offset = 0x4, fixed_abs, tag = 'smem constant byte address 0x4 - core index']
  #allocation1 [shape = 'u32[144,128]{1,0:T(1,128)}', space=vmem, size = 0x12000, scoped, tag = 'internal scratch']
  %s0 = inlined_call_operand.vmem [shape: f32[2,16,64], index: 0, kind: input, shape index: {}]
  %s1 = inlined_call_operand.vmem [shape: f32[64,128], index: 1, kind: input, shape index: {}]
  %s2 = inlined_call_operand.vmem [shape: f32[1,128], index: 2, kind: input, shape index: {}]
  %s3 = inlined_call_operand.vmem [shape: f32[128,64], index: 3, kind: input, shape index: {}]
  %s4 = inlined_call_operand.vmem [shape: f32[1,64], index: 4, kind: input, shape index: {}]
  %s5 = inlined_call_operand.hbm [shape: f32[2,16,64], index: 5, kind: output, shape index: {}]
  %s6 = sld [smem:[#allocation0]]
  $region53: #{feedforward_forward.1} parent=0
    _
  %s8 = ssub.s32 1, %s6
  %s9 = scalar_select 0, %s8, %s6
  $region1: #{feedforward_forward.1} parent=0
    #allocation2 [shape = 'u8[16384]{0}', space=vmem, size = 0x4000, scoped, tag = 'output window, operand 0']
    #allocation3 [shape = 's32[2]{0}', space=sflag, size = 0x8, scoped, tag = 'scoped memory for feedforward_forward.1']
    %10 = vsyncpa [#allocation3], 0
    %s11 = scalar_lea.sflag [#allocation3], 1
    %12 = vsyncpa %s11, 0
    loop: start=0, step=1, limit=4
    $region2: #{feedforward_forward.1} parent=1 // loop_pre_header
      _
    $region3: #{feedforward_forward.1} parent=1 // loop_header
      %s14 = sphi 0, %s18
      %p15 = scmp.ge.s32.totalorder %s14, 4
      %s24 = sphi 0, %s26
      %s27 = sphi 0, %s24
      %s28 = sphi 0, %s27
      %s44 = sphi 0, %s28
      %s48 = sphi 0, %s48
      %s50 = sphi 0, %s48
      %s51 = sphi 0, %s50
      %s65 = sphi 0, %s51
      %s69 = sphi 0, %s69
      %s71 = sphi 0, %s69
      %s72 = sphi 0, %s71
      %s86 = sphi 0, %s72
      %s90 = sphi 0, %s90
      %s92 = sphi 0, %s90
      %s93 = sphi 0, %s92
      %s107 = sphi 0, %s93
      %s111 = sphi 0, %s111
      %s113 = sphi 0, %s111
      %s114 = sphi 0, %s113
      %s128 = sphi 0, %s114
      %s134 = sphi 0, %s136
      %s137 = sphi 0, %s134
      %s138 = sphi 0, %s137
      %s154 = sphi 0, %s138
    $region4: #{feedforward_forward.1} parent=1 // loop_header_branch
      %17 = sbr.rel (%p15) target = $region8
    $region5: #{feedforward_forward.1} parent=1 // loop_body
      %s19 = ssub.s32 %s14, 1
      %s20 = ssub.s32 %s14, 2
      %s21 = sadd.s32 %s14, 1
      %s22 = ssub.s32 %s14, %s21
      %p23 = scmp.eq.s32.totalorder %s22, 0
      %s25 = sadd.s32 %s24, 1
      %s26 = scalar_select %p23, %s24, %s25
      %p29 = pneg %p23
      %p30 = scmp.eq.s32.totalorder %s14, 1
      %p31 = por %p29, %p30
      %p32 = scmp.ne.s32.totalorder %s24, %s27
      %p33 = scmp.eq.s32.totalorder %s14, 0
      %p34 = por %p32, %p33
      %p35 = scmp.ne.s32.totalorder %s24, %s27
      %p36 = scmp.eq.s32.totalorder %s19, 1
      %p37 = por %p35, %p36
      %p38 = scmp.ne.s32.totalorder %s27, %s28
      %p39 = scmp.eq.s32.totalorder %s19, 0
      %p40 = por %p38, %p39
      %p41 = scmp.ne.s32.totalorder %s27, %s28
      %p42 = scmp.eq.s32.totalorder %s20, 1
      %p43 = por %p41, %p42
      %p45 = scmp.ne.s32.totalorder %s28, %s44
      %p46 = scmp.eq.s32.totalorder %s20, 0
      %p47 = por %p45, %p46
      %s49 = sadd.s32 %s48, 1
      %p52 = scmp.eq.s32.totalorder %s14, 1
      %p53 = scmp.ne.s32.totalorder %s48, %s50
      %p54 = scmp.eq.s32.totalorder %s14, 0
      %p55 = por %p53, %p54
      %p56 = scmp.ne.s32.totalorder %s48, %s50
      %p57 = scmp.eq.s32.totalorder %s19, 1
      %p58 = por %p56, %p57
      %p59 = scmp.ne.s32.totalorder %s50, %s51
      %p60 = scmp.eq.s32.totalorder %s19, 0
      %p61 = por %p59, %p60
      %p62 = scmp.ne.s32.totalorder %s50, %s51
      %p63 = scmp.eq.s32.totalorder %s20, 1
      %p64 = por %p62, %p63
      %p66 = scmp.ne.s32.totalorder %s51, %s65
      %p67 = scmp.eq.s32.totalorder %s20, 0
      %p68 = por %p66, %p67
      %s70 = sadd.s32 %s69, 1
      %p73 = scmp.eq.s32.totalorder %s14, 1
      %p74 = scmp.ne.s32.totalorder %s69, %s71
      %p75 = scmp.eq.s32.totalorder %s14, 0
      %p76 = por %p74, %p75
      %p77 = scmp.ne.s32.totalorder %s69, %s71
      %p78 = scmp.eq.s32.totalorder %s19, 1
      %p79 = por %p77, %p78
      %p80 = scmp.ne.s32.totalorder %s71, %s72
      %p81 = scmp.eq.s32.totalorder %s19, 0
      %p82 = por %p80, %p81
      %p83 = scmp.ne.s32.totalorder %s71, %s72
      %p84 = scmp.eq.s32.totalorder %s20, 1
      %p85 = por %p83, %p84
      %p87 = scmp.ne.s32.totalorder %s72, %s86
      %p88 = scmp.eq.s32.totalorder %s20, 0
      %p89 = por %p87, %p88
      %s91 = sadd.s32 %s90, 1
      %p94 = scmp.eq.s32.totalorder %s14, 1
      %p95 = scmp.ne.s32.totalorder %s90, %s92
      %p96 = scmp.eq.s32.totalorder %s14, 0
      %p97 = por %p95, %p96
      %p98 = scmp.ne.s32.totalorder %s90, %s92
      %p99 = scmp.eq.s32.totalorder %s19, 1
      %p100 = por %p98, %p99
      %p101 = scmp.ne.s32.totalorder %s92, %s93
      %p102 = scmp.eq.s32.totalorder %s19, 0
      %p103 = por %p101, %p102
      %p104 = scmp.ne.s32.totalorder %s92, %s93
      %p105 = scmp.eq.s32.totalorder %s20, 1
      %p106 = por %p104, %p105
      %p108 = scmp.ne.s32.totalorder %s93, %s107
      %p109 = scmp.eq.s32.totalorder %s20, 0
      %p110 = por %p108, %p109
      %s112 = sadd.s32 %s111, 1
      %p115 = scmp.eq.s32.totalorder %s14, 1
      %p116 = scmp.ne.s32.totalorder %s111, %s113
      %p117 = scmp.eq.s32.totalorder %s14, 0
      %p118 = por %p116, %p117
      %p119 = scmp.ne.s32.totalorder %s111, %s113
      %p120 = scmp.eq.s32.totalorder %s19, 1
      %p121 = por %p119, %p120
      %p122 = scmp.ne.s32.totalorder %s113, %s114
      %p123 = scmp.eq.s32.totalorder %s19, 0
      %p124 = por %p122, %p123
      %p125 = scmp.ne.s32.totalorder %s113, %s114
      %p126 = scmp.eq.s32.totalorder %s20, 1
      %p127 = por %p125, %p126
      %p129 = scmp.ne.s32.totalorder %s114, %s128
      %p130 = scmp.eq.s32.totalorder %s20, 0
      %p131 = por %p129, %p130
      %s132 = ssub.s32 %s14, %s21
      %p133 = scmp.eq.s32.totalorder %s132, 0
      %s135 = sadd.s32 %s134, 1
      %s136 = scalar_select %p133, %s134, %s135
      %p139 = pneg %p133
      %p140 = scmp.eq.s32.totalorder %s14, 1
      %p141 = por %p139, %p140
      %p142 = scmp.ne.s32.totalorder %s134, %s137
      %p143 = scmp.eq.s32.totalorder %s14, 0
      %p144 = por %p142, %p143
      %p145 = scmp.ne.s32.totalorder %s134, %s137
      %p146 = scmp.eq.s32.totalorder %s19, 1
      %p147 = por %p145, %p146
      %p148 = scmp.ne.s32.totalorder %s137, %s138
      %p149 = scmp.eq.s32.totalorder %s19, 0
      %p150 = por %p148, %p149
      %p151 = scmp.ne.s32.totalorder %s137, %s138
      %p152 = scmp.eq.s32.totalorder %s20, 1
      %p153 = por %p151, %p152
      %p155 = scmp.ne.s32.totalorder %s138, %s154
      %p156 = scmp.eq.s32.totalorder %s20, 0
      %p157 = por %p155, %p156
      %p158 = scmp.le.s32.totalorder 1, %s14
      %p159 = scmp.lt.s32.totalorder %s14, 3
      %p160 = pnand %p158, %p159
      %p161 = pneg %p160
      // Predicated region
      $region9: #{feedforward_forward.1} parent=5 // pred_check
        _
      $region10: #{feedforward_forward.1} parent=5 // pred_check_branch
        %163 = sbr.rel (%p160) target = $region12
      $region11: #{feedforward_forward.1} parent=5 // pred_region
        %s164 = ssub.s32 %s14, 1
        // Predicated region
        $region13: #{feedforward_forward.1} parent=11 // pred_check
          %p165 = pneg %p61
        $region14: #{feedforward_forward.1} parent=11 // pred_check_branch
          %167 = sbr.rel (%p165) target = $region16
        $region15: #{feedforward_forward.1} parent=11 // pred_region
          _
        $region16: #{feedforward_forward.1} parent=11 // pred_fallthru
          _
        // Predicated region
        $region17: #{feedforward_forward.1} parent=11 // pred_check
          %p168 = pneg %p82
        $region18: #{feedforward_forward.1} parent=11 // pred_check_branch
          %170 = sbr.rel (%p168) target = $region20
        $region19: #{feedforward_forward.1} parent=11 // pred_region
          _
        $region20: #{feedforward_forward.1} parent=11 // pred_fallthru
          _
        // Predicated region
        $region21: #{feedforward_forward.1} parent=11 // pred_check
          %p171 = pneg %p103
        $region22: #{feedforward_forward.1} parent=11 // pred_check_branch
          %173 = sbr.rel (%p171) target = $region24
        $region23: #{feedforward_forward.1} parent=11 // pred_region
          _
        $region24: #{feedforward_forward.1} parent=11 // pred_fallthru
          _
        // Predicated region
        $region25: #{feedforward_forward.1} parent=11 // pred_check
          %p174 = pneg %p124
        $region26: #{feedforward_forward.1} parent=11 // pred_check_branch
          %176 = sbr.rel (%p174) target = $region28
        $region27: #{feedforward_forward.1} parent=11 // pred_region
          _
        $region28: #{feedforward_forward.1} parent=11 // pred_fallthru
          _
      $region12: #{feedforward_forward.1} parent=5 // pred_fallthru
        _
      %p177 = scmp.lt.s32.totalorder %s14, 2
      // Predicated region
      $region29: #{feedforward_forward.1} parent=5 // pred_check
        %p178 = pneg %p177
      $region30: #{feedforward_forward.1} parent=5 // pred_check_branch
        %180 = sbr.rel (%p178) target = $region32
      $region31: #{feedforward_forward.1} parent=5 // pred_region
        // Predicated region
        $region33: #{feedforward_forward.1} parent=31 // pred_check
          %p181 = pneg %p34
        $region34: #{feedforward_forward.1} parent=31 // pred_check_branch
          %183 = sbr.rel (%p181) target = $region36
        $region35: #{feedforward_forward.1} parent=31 // pred_region
          %p184 = scmp.lt.s32.totalorder %s14, 1
          %s185 = scalar_select %p184, %s14, 1
          %s186 = smul.addr %s185, 2
          %s187 = smul.addr %s186, 8
          %s188 = scalar_lea.vmem %s0, %s187
        $region36: #{feedforward_forward.1} parent=31 // pred_fallthru
          _
      $region32: #{feedforward_forward.1} parent=5 // pred_fallthru
        _
      %p189 = scmp.le.s32.totalorder 1, %s14
      %p190 = scmp.lt.s32.totalorder %s14, 3
      %p191 = pnand %p189, %p190
      %p192 = pneg %p191
      // Predicated region
      $region37: #{feedforward_forward.1} parent=5 // pred_check
        _
      $region38: #{feedforward_forward.1} parent=5 // pred_check_branch
        %194 = sbr.rel (%p191) target = $region40
      $region39: #{feedforward_forward.1} parent=5 // pred_region
        %s195 = ssub.s32 %s14, 1
        %p196 = scmp.lt.s32.totalorder %s19, 1
        %s197 = scalar_select %p196, %s19, 1
        %s198 = smul.addr %s197, 2
        %s199 = smul.addr %s198, 8
        %s200 = scalar_lea.vmem %s0, %s199
        %p201 = pneg %p40
        %p202 = pneg %p37
        %p203 = pneg %p61
        %p204 = pneg %p58
        %p205 = pneg %p82
        %p206 = pneg %p79
        %p207 = pneg %p103
        %p208 = pneg %p100
        %p209 = pneg %p124
        %p210 = pneg %p121
        %p211 = pneg %p150
        %p212 = pneg %p147
        %s213 = sand.u32 %s137, 1
        %s214 = scalar_lea.sflag [#allocation3], %s213
        %s215 = sand.u32 %s137, 1
        %s216 = smul.addr %s215, 16
        %s217 = scalar_lea.vmem [#allocation2], %s216
        %p218 = scmp.lt.s32.totalorder %s19, 1
        %s219 = scalar_select %p218, %s19, 1
        %s220 = smul.addr %s219, 2
        %s221 = smul.addr %s220, 8
        %s222 = scalar_lea.vmem %s0, %s221
        %v223 = vld [vmem:[%s222] sm:$0xff]
        %v224 = vld [vmem:[%s222 + $0x8] sm:$0xff]
        %v225 = vld [vmem:[%s1] sm:$0xff]
        %v226 = vld [vmem:[%s1 + $0x8] sm:$0xff]
        %v227 = vld [vmem:[%s1 + $0x10] sm:$0xff]
        %v228 = vld [vmem:[%s1 + $0x18] sm:$0xff]
        %v229 = vld [vmem:[%s1 + $0x20] sm:$0xff]
        %v230 = vld [vmem:[%s1 + $0x28] sm:$0xff]
        %v231 = vld [vmem:[%s1 + $0x30] sm:$0xff]
        %v232 = vld [vmem:[%s1 + $0x38] sm:$0xff]
        %v233 = vld [vmem:[%s2] sm:$0x1]
        %v235 = vlaneseq
        %v236 = vshrl.u32 %v235, 7
        %v237 = vsub.s32 0, %v236
        %v238 = vrot.slane %v233, %v237
        %vm240 = vcmask 523264
        %v242 = vsel %vm240, %v223, 0
        %v245 = vsel %vm240, %v224, 0
        %247 = vmatprep.subr.mxu0 0.0
        %248 = vmatpush1.msra.mxu0 %v225
        %249 = vmatprep.subr.mxu0 0.0
        %250 = vmatpush1.msra.mxu0 %v226
        %251 = vmatprep.subr.mxu0 0.0
        %252 = vmatpush1.msra.mxu0 %v227
        %253 = vmatprep.subr.mxu0 0.0
        %254 = vmatpush1.msra.mxu0 %v228
        %255 = vmatprep.subr.mxu0 0.0
        %256 = vmatpush1.msra.mxu0 %v229
        %257 = vmatprep.subr.mxu0 0.0
        %258 = vmatpush1.msra.mxu0 %v230
        %259 = vmatprep.subr.mxu0 0.0
        %260 = vmatpush1.msra.mxu0 %v231
        %261 = vmatprep.subr.mxu0 0.0
        %262 = vmatpush1.msra.mxu0 %v232
        %263 = vmatprep.subr.mxu0 0.0
        %264 = vmatpush1.msra.mxu0 0.0
        %265 = vmatprep.subr.mxu0 0.0
        %266 = vmatpush1.msra.mxu0 0.0
        %267 = vmatprep.subr.mxu0 0.0
        %268 = vmatpush1.msra.mxu0 0.0
        %269 = vmatprep.subr.mxu0 0.0
        %270 = vmatpush1.msra.mxu0 0.0
        %271 = vmatprep.subr.mxu0 0.0
        %272 = vmatpush1.msra.mxu0 0.0
        %273 = vmatprep.subr.mxu0 0.0
        %274 = vmatpush1.msra.mxu0 0.0
        %275 = vmatprep.subr.mxu0 0.0
        %276 = vmatpush1.msra.mxu0 0.0
        %277 = vmatprep.subr.mxu0 0.0
        %278 = vmatpush1.msra.mxu0 0.0
        %279 = vmatprep.subr.mxu0 0.0
        %280 = vmatpush1.msra.mxu0 0.0
        %281 = vmatprep.subr.mxu0 0.0
        %282 = vmatpush1.msra.mxu0 0.0
        %283 = vmatprep.subr.mxu0 0.0
        %284 = vmatpush1.msra.mxu0 0.0
        %285 = vmatprep.subr.mxu0 0.0
        %286 = vmatpush1.msra.mxu0 0.0
        %287 = vmatprep.subr.mxu0 0.0
        %288 = vmatpush1.msra.mxu0 0.0
        %289 = vmatprep.subr.mxu0 0.0
        %290 = vmatpush1.msra.mxu0 0.0
        %291 = vmatprep.subr.mxu0 0.0
        %292 = vmatpush1.msra.mxu0 0.0
        %293 = vmatprep.subr.mxu0 0.0
        %294 = vmatpush1.msra.mxu0 0.0
        %295 = vmatprep.subr.mxu0 0.0
        %296 = vmatpush1.msra.mxu0 0.0
        %297 = vmatprep.subr.mxu0 0.0
        %298 = vmatpush1.msra.mxu0 0.0
        %299 = vmatprep.subr.mxu0 0.0
        %300 = vmatpush1.msra.mxu0 0.0
        %301 = vmatprep.subr.mxu0 0.0
        %302 = vmatpush1.msra.mxu0 0.0
        %303 = vmatprep.subr.mxu0 0.0
        %304 = vmatpush1.msra.mxu0 0.0
        %305 = vmatprep.subr.mxu0 0.0
        %306 = vmatpush1.msra.mxu0 0.0
        %307 = vmatprep.subr.mxu0 0.0
        %308 = vmatpush1.msra.mxu0 0.0
        %309 = vmatprep.subr.mxu0 0.0
        %310 = vmatpush1.msra.mxu0 0.0
        %311 = vmatprep.mubr.f32.mxu0 0.0
        %312 = vmatmul.mubr.f32.gmra.mrb[0].mxu0 %v242
        %v313 = vpop.f32.mrb[0].mxu0
        %v314 = vadd.f32 %v238, %v313
        %v315 = vpop.f32.mrb[0].mxu0
        %316 = vmatprep.mubr.f32.mxu0 0.0
        %317 = vmatmul.mubr.f32.gmra.mrb[0].mxu0 %v245
        %v318 = vpop.f32.mrb[0].mxu0
        %v319 = vadd.f32 %v238, %v318
        %v320 = vpop.f32.mrb[0].mxu0
        %321 = vdwg.mxu0
        %v322 = vmax.f32 %v314, 0.0
        %v323 = vmax.f32 %v319, 0.0
        %v324 = vld [vmem:[%s3] sm:$0xff]
        %v325 = vld [vmem:[%s3 + $0x8] sm:$0xff]
        %v326 = vld [vmem:[%s3 + $0x10] sm:$0xff]
        %v327 = vld [vmem:[%s3 + $0x18] sm:$0xff]
        %v328 = vld [vmem:[%s3 + $0x20] sm:$0xff]
        %v329 = vld [vmem:[%s3 + $0x28] sm:$0xff]
        %v330 = vld [vmem:[%s3 + $0x30] sm:$0xff]
        %v331 = vld [vmem:[%s3 + $0x38] sm:$0xff]
        %v332 = vld [vmem:[%s3 + $0x40] sm:$0xff]
        %v333 = vld [vmem:[%s3 + $0x48] sm:$0xff]
        %v334 = vld [vmem:[%s3 + $0x50] sm:$0xff]
        %v335 = vld [vmem:[%s3 + $0x58] sm:$0xff]
        %v336 = vld [vmem:[%s3 + $0x60] sm:$0xff]
        %v337 = vld [vmem:[%s3 + $0x68] sm:$0xff]
        %v338 = vld [vmem:[%s3 + $0x70] sm:$0xff]
        %v339 = vld [vmem:[%s3 + $0x78] sm:$0xff]
        %v340 = vld [vmem:[%s4] sm:$0x1]
        %v342 = vlaneseq
        %v343 = vshrl.u32 %v342, 7
        %v344 = vsub.s32 0, %v343
        %v345 = vrot.slane %v340, %v344
        %347 = vmatprep.subr.mxu0 0.0
        %348 = vmatpush1.msra.mxu0 %v324
        %349 = vmatprep.subr.mxu0 0.0
        %350 = vmatpush1.msra.mxu0 %v325
        %351 = vmatprep.subr.mxu0 0.0
        %352 = vmatpush1.msra.mxu0 %v326
        %353 = vmatprep.subr.mxu0 0.0
        %354 = vmatpush1.msra.mxu0 %v327
        %355 = vmatprep.subr.mxu0 0.0
        %356 = vmatpush1.msra.mxu0 %v328
        %357 = vmatprep.subr.mxu0 0.0
        %358 = vmatpush1.msra.mxu0 %v329
        %359 = vmatprep.subr.mxu0 0.0
        %360 = vmatpush1.msra.mxu0 %v330
        %361 = vmatprep.subr.mxu0 0.0
        %362 = vmatpush1.msra.mxu0 %v331
        %363 = vmatprep.subr.mxu0 0.0
        %364 = vmatpush1.msra.mxu0 %v332
        %365 = vmatprep.subr.mxu0 0.0
        %366 = vmatpush1.msra.mxu0 %v333
        %367 = vmatprep.subr.mxu0 0.0
        %368 = vmatpush1.msra.mxu0 %v334
        %369 = vmatprep.subr.mxu0 0.0
        %370 = vmatpush1.msra.mxu0 %v335
        %371 = vmatprep.subr.mxu0 0.0
        %372 = vmatpush1.msra.mxu0 %v336
        %373 = vmatprep.subr.mxu0 0.0
        %374 = vmatpush1.msra.mxu0 %v337
        %375 = vmatprep.subr.mxu0 0.0
        %376 = vmatpush1.msra.mxu0 %v338
        %377 = vmatprep.subr.mxu0 0.0
        %378 = vmatpush1.msra.mxu0 %v339
        %379 = vmatprep.subr.mxu0 0.0
        %380 = vmatpush1.msra.mxu0 0.0
        %381 = vmatprep.subr.mxu0 0.0
        %382 = vmatpush1.msra.mxu0 0.0
        %383 = vmatprep.subr.mxu0 0.0
        %384 = vmatpush1.msra.mxu0 0.0
        %385 = vmatprep.subr.mxu0 0.0
        %386 = vmatpush1.msra.mxu0 0.0
        %387 = vmatprep.subr.mxu0 0.0
        %388 = vmatpush1.msra.mxu0 0.0
        %389 = vmatprep.subr.mxu0 0.0
        %390 = vmatpush1.msra.mxu0 0.0
        %391 = vmatprep.subr.mxu0 0.0
        %392 = vmatpush1.msra.mxu0 0.0
        %393 = vmatprep.subr.mxu0 0.0
        %394 = vmatpush1.msra.mxu0 0.0
        %395 = vmatprep.subr.mxu0 0.0
        %396 = vmatpush1.msra.mxu0 0.0
        %397 = vmatprep.subr.mxu0 0.0
        %398 = vmatpush1.msra.mxu0 0.0
        %399 = vmatprep.subr.mxu0 0.0
        %400 = vmatpush1.msra.mxu0 0.0
        %401 = vmatprep.subr.mxu0 0.0
        %402 = vmatpush1.msra.mxu0 0.0
        %403 = vmatprep.subr.mxu0 0.0
        %404 = vmatpush1.msra.mxu0 0.0
        %405 = vmatprep.subr.mxu0 0.0
        %406 = vmatpush1.msra.mxu0 0.0
        %407 = vmatprep.subr.mxu0 0.0
        %408 = vmatpush1.msra.mxu0 0.0
        %409 = vmatprep.subr.mxu0 0.0
        %410 = vmatpush1.msra.mxu0 0.0
        %411 = vmatprep.mubr.f32.mxu0 0.0
        %412 = vmatmul.mubr.f32.gmra.mrb[0].mxu0 %v322
        %v413 = vpop.f32.mrb[0].mxu0
        %v414 = vadd.f32 %v345, %v413
        %v415 = vpop.f32.mrb[0].mxu0
        %416 = vmatprep.mubr.f32.mxu0 0.0
        %417 = vmatmul.mubr.f32.gmra.mrb[0].mxu0 %v323
        %v418 = vpop.f32.mrb[0].mxu0
        %v419 = vadd.f32 %v345, %v418
        %v420 = vpop.f32.mrb[0].mxu0
        %421 = vdwg.mxu0
        %422 = vst.msk [vmem:[%s217] sm:$0xff] %vm240, %v414
        %423 = vst.msk [vmem:[%s217 + $0x8] sm:$0xff] %vm240, %v419
        %s424 = sand.u32 %s137, 1
        %s425 = scalar_lea.sflag [#allocation3], %s424
        %s426 = sand.u32 %s137, 1
        %s427 = smul.addr %s426, 16
        %s428 = scalar_lea.vmem [#allocation2], %s427
        // Predicated region
        $region41: #{feedforward_forward.1} parent=39 // pred_check
          %p429 = pneg %p147
        $region42: #{feedforward_forward.1} parent=39 // pred_check_branch
          %431 = sbr.rel (%p429) target = $region44
        $region43: #{feedforward_forward.1} parent=39 // pred_region
          %s433 = ssub.s32 256, 256
          %434 = vsyncadd %s425, %s433
          %s435 = smul.addr %s19, 2
          %s436 = smul.addr %s435, 128
          %s437 = scalar_lea.hbm %s5, %s436
          %s438 = sshll.u32 %s428, 4
          %s439 = int_to_ptr.vmem [resolvable:$true] %s438
          %444 = dma.vmem_to_hbm [thread:$0]  %s439, 256, %s437, %s425, 128, 128, 8
        $region44: #{feedforward_forward.1} parent=39 // pred_fallthru
          _
      $region40: #{feedforward_forward.1} parent=5 // pred_fallthru
        _
      %p445 = scmp.le.s32.totalorder 2, %s14
      // Predicated region
      $region45: #{feedforward_forward.1} parent=5 // pred_check
        %p446 = pneg %p445
      $region46: #{feedforward_forward.1} parent=5 // pred_check_branch
        %448 = sbr.rel (%p446) target = $region48
      $region47: #{feedforward_forward.1} parent=5 // pred_region
        %s449 = ssub.s32 %s14, 2
        // Predicated region
        $region49: #{feedforward_forward.1} parent=47 // pred_check
          %p450 = pneg %p153
        $region50: #{feedforward_forward.1} parent=47 // pred_check_branch
          %452 = sbr.rel (%p450) target = $region52
        $region51: #{feedforward_forward.1} parent=47 // pred_region
          %s453 = sand.u32 %s138, 1
          %s454 = scalar_lea.sflag [#allocation3], %s453
          %s455 = sand.u32 %s138, 1
          %s456 = smul.addr %s455, 16
          %s457 = scalar_lea.vmem [#allocation2], %s456
          %458 = dma.done %s454, 256
        $region52: #{feedforward_forward.1} parent=47 // pred_fallthru
          _
      $region48: #{feedforward_forward.1} parent=5 // pred_fallthru
        _
    $region6: #{feedforward_forward.1} parent=1 // loop_footer
      %s18 = sadd.s32 1, %s14
    $region7: #{feedforward_forward.1} parent=1 // loop_footer_branch
      %13 = sbr.rel target = $region3
    $region8: #{feedforward_forward.1} parent=1 // loop_exit
      _
    %459 = vsyncpa [#allocation3], 1
    %s460 = scalar_lea.sflag [#allocation3], 1
    %461 = vsyncpa %s460, 1

</llo_original>
